<compile_context>
chip_gen: v5e
topology: v5e:2x2
jax: 0.10.0
libtpu: 0.0.40
codegen_flags: <defaults>
</compile_context>

<pallas_src>
from functools import partial

import jax
import jax.numpy as jnp
from jax import lax
from jax.experimental import pallas as pl
from jax.experimental.pallas import tpu as pltpu

BN_EPS = 1e-5


def _round_up(x, m):
    return ((x + m - 1) // m) * m


# ----------------------- kernel 1: 1x1 conv + BN + SiLU (as matmul) -----------

def _silu_matmul_kernel(x_ref, w_ref, b_ref, o_ref):
    # x: (tm, r*cin) f32, w: (r*cin, r*cout) bf16 (block-diagonal), b: (1, r*cout) f32
    y = jnp.dot(x_ref[...].astype(jnp.bfloat16), w_ref[...],
                preferred_element_type=jnp.float32) + b_ref[...]
    # numerically-stable SiLU: exp on the EUP, f32 VPU elementwise (v5e-friendly).
    z = jnp.exp(-jnp.abs(y))
    sig = jnp.where(y >= 0.0, 1.0 / (1.0 + z), z / (1.0 + z))
    o_ref[...] = (y * sig).astype(o_ref.dtype)


def conv1x1_bn_silu(x_nhwc, w, b, tile_rows=1024):
    """x: (N,H,W,Cin); w: (Cin,Cout) BN-folded; b: (Cout,) BN-folded."""
    n, h, wd, cin = x_nhwc.shape
    cout = w.shape[1]
    m = n * h * wd

    # Lane-dense widening factor: present the output as (M/r, r*cout) with
    # r*cout a multiple of 128 (unmasked stores).  r = 1 when cout >= 128.
    r = (128 // cout) if (cout < 128 and 128 % cout == 0) else 1

    x2d = x_nhwc.reshape(m, cin)
    m_r = _round_up(m, r)
    if m_r != m:
        x2d = jnp.pad(x2d, ((0, m_r - m), (0, 0)))
    m2 = m_r // r
    xw = x2d.reshape(m2, r * cin)                      # metadata-only reshape

    tm = min(tile_rows, _round_up(m2, 8))
    m2_pad = _round_up(m2, tm)
    if m2_pad != m2:
        xw = jnp.pad(xw, ((0, m2_pad - m2), (0, 0)))

    # Block-diagonal weight: row j of xw holds r consecutive pixels, so
    # xw @ kron(I_r, W) gives the lane-dense (r*cout)-wide output directly.
    w_wide = jnp.kron(jnp.eye(r, dtype=w.dtype), w).astype(jnp.bfloat16)
    b_wide = jnp.tile(b, r).reshape(1, r * cout)

    out = pl.pallas_call(
        _silu_matmul_kernel,
        out_shape=jax.ShapeDtypeStruct((m2_pad, r * cout), x_nhwc.dtype),
        grid=(m2_pad // tm,),
        in_specs=[pl.BlockSpec((tm, r * cin), lambda i: (i, 0)),
                  pl.BlockSpec((r * cin, r * cout), lambda i: (0, 0)),
                  pl.BlockSpec((1, r * cout), lambda i: (0, 0))],
        out_specs=pl.BlockSpec((tm, r * cout), lambda i: (i, 0)),
        compiler_params=pltpu.CompilerParams(dimension_semantics=("parallel",)),
    )(xw, w_wide, b_wide)

    out = out.reshape(m2_pad * r, cout)[:m]
    return out.reshape(n, h, wd, cout)


# --------- kernel 2: conv3d(3x3x3)+BN3d+LeakyReLU + residual + depth pools -----

def _msib_fuse_kernel(a2_ref, a3_ref, a4_ref, w_ref, b_ref, o_ref, xpad,
                      *, up3, up4):
    # a2_ref: (1,H,W,C) full-res; a3_ref/a4_ref: (1,hs,ws,C) low-res scale maps
    # w_ref : (3, 9C, C) bf16, rows ordered (kh, kw, cin) per kd; b_ref: (1,C) f32
    # xpad  : VMEM scratch (3, H+2, W+2, C) f32 -- spatially padded fused volume
    _, H, W, C = a2_ref.shape
    HW = H * W

    def upsample(x, rh, rw):
        # nearest-neighbor integer-factor block repeat, done in VMEM.
        hs, ws, c = x.shape
        if rw > 1:
            x = jnp.broadcast_to(x[:, :, None, :], (hs, ws, rw, c)).reshape(hs, ws * rw, c)
        if rh > 1:
            x = jnp.broadcast_to(x[:, None, :, :], (hs, rh, ws * rw, c)).reshape(hs * rh, ws * rw, c)
        return x

    # ---- assemble the padded fused volume interior (+ halo) in VMEM.
    # Only the two H-halo rows are stored as zeros; the W halo is fused into the
    # full-width interior row store (unmasked along sublanes).  Done every grid
    # step (cheap, O(H+W)) so the batch axis stays safely megacore-parallel.
    zrow = jnp.zeros((1, W + 2, C), jnp.float32)
    zcol = jnp.zeros((H, 1, C), jnp.float32)
    planes = []                                   # interior (HW, C) f32, kept for residual
    srcs = ((a2_ref, (1, 1)), (a3_ref, up3), (a4_ref, up4))
    for d, (ref, (rh, rw)) in enumerate(srcs):
        x = upsample(ref[0].astype(jnp.float32), rh, rw)          # (H, W, C)
        xpad[d, 0:1, :, :] = zrow
        xpad[d, H + 1:H + 2, :, :] = zrow
        xpad[d, 1:H + 1, :, :] = jnp.concatenate([zcol, x, zcol], axis=1)
        planes.append(x.reshape(HW, C))

    bias = b_ref[...].astype(jnp.float32)                          # (1, C)

    # ---- conv3d: one im2col slab per *input* depth plane, reused for every
    # output depth it feeds; taps that hit the depth zero-padding are skipped.
    acc = [jnp.zeros((HW, C), jnp.float32) for _ in range(3)]
    for zd in range(3):
        taps = [xpad[zd, kh:kh + H, kw:kw + W, :].reshape(HW, C)
                for kh in range(3) for kw in range(3)]
        # TODO(synk): build the 3 kw-shifted plane variants once via pltpu.roll
        # (XLU slot) and reuse across kh to cut unaligned slice copies ~3x.
        out_depths = range(max(0, zd - 1), min(2, zd + 1) + 1)
        if C >= 128:
            # K = C already fills the MXU contraction; skip the 9x-wide slab.
            for d in out_depths:
                kd = zd - d + 1
                for t in range(9):
                    acc[d] = acc[d] + jnp.dot(
                        taps[t].astype(jnp.bfloat16),
                        w_ref[kd, t * C:(t + 1) * C, :],
                        preferred_element_type=jnp.float32)
        else:
            slab = jnp.concatenate(taps, axis=-1).astype(jnp.bfloat16)   # (HW, 9C)
            for d in out_depths:
                kd = zd - d + 1
                acc[d] = acc[d] + jnp.dot(slab, w_ref[kd],
                                          preferred_element_type=jnp.float32)

    # ---- bias + LeakyReLU(0.1) + residual, streaming max/avg pool over depth.
    m_run = s_run = None
    for d in range(3):
        y = acc[d] + bias
        act = jnp.where(y >= 0.0, y, 0.1 * y) + planes[d]
        m_run = act if d == 0 else jnp.maximum(m_run, act)
        s_run = act if d == 0 else s_run + act
    out = m_run + s_run * (1.0 / 3.0)
    o_ref[...] = out.reshape(1, H, W * C).astype(o_ref.dtype)      # lane-dense store


def msib_fuse(a2, a3, a4, up3, up4, w3d, b3d):
    """a2: (N,H,W,C); a3/a4: low-res (N,hs,ws,C) with integer upsample factors
    up3/up4; w3d: (3,3,3,C,C)=(kd,kh,kw,cin,cout) BN-folded; b3d: (C,)."""
    n, h, w, c = a2.shape
    h3, w3 = a3.shape[1], a3.shape[2]
    h4, w4 = a4.shape[1], a4.shape[2]
    assert h3 * up3[0] == h and w3 * up3[1] == w
    assert h4 * up4[0] == h and w4 * up4[1] == w

    w_slab = w3d.reshape(3, 9 * c, c).astype(jnp.bfloat16)

    # explicit VMEM budget with headroom (scratch + double-buffered blocks + temps).
    in_bytes = 4 * c * (h * w + h3 * w3 + h4 * w4) + 2 * 27 * c * c + 4 * c
    out_bytes = 4 * h * w * c
    scratch_bytes = 4 * 3 * (h + 2) * (w + 2) * c
    vmem_limit = int(min(64 * 2**20,
                         max(8 * 2**20, 6 * (scratch_bytes + 2 * (in_bytes + out_bytes)))))

    kern = partial(_msib_fuse_kernel, up3=up3, up4=up4)
    out = pl.pallas_call(
        kern,
        out_shape=jax.ShapeDtypeStruct((n, h, w * c), a2.dtype),
        grid=(n,),
        in_specs=[pl.BlockSpec((1, h, w, c), lambda i: (i, 0, 0, 0)),
                  pl.BlockSpec((1, h3, w3, c), lambda i: (i, 0, 0, 0)),
                  pl.BlockSpec((1, h4, w4, c), lambda i: (i, 0, 0, 0)),
                  pl.BlockSpec((3, 9 * c, c), lambda i: (0, 0, 0)),
                  pl.BlockSpec((1, c), lambda i: (0, 0))],
        out_specs=pl.BlockSpec((1, h, w * c), lambda i: (i, 0, 0)),
        scratch_shapes=[pltpu.VMEM((3, h + 2, w + 2, c), jnp.float32)],
        compiler_params=pltpu.CompilerParams(
            dimension_semantics=("parallel",),
            vmem_limit_bytes=vmem_limit),
    )(a2, a3, a4, w_slab, b3d.reshape(1, c))
    return out.reshape(n, h, w, c)


# --------------------------------- glue ---------------------------------------

def nearest_resize(x_nhwc, out_h, out_w):
    """F.interpolate(mode='nearest'): src = floor(dst * in / out).  Fallback only."""
    _, h, w, _ = x_nhwc.shape
    ih = (jnp.arange(out_h) * h) // out_h
    iw = (jnp.arange(out_w) * w) // out_w
    return x_nhwc[:, ih][:, :, iw]


def fold_bn(gamma, beta, mean, var):
    s = gamma / jnp.sqrt(var + BN_EPS)
    return s, beta - mean * s


def init_params(key, x2_ch, x3_ch, x4_ch, out_ch):
    ks = jax.random.split(key, 24)
    p = {}

    def conv_bn_fold(kw, kg, kb, km, kv, cin):
        w = jax.random.normal(kw, (cin, out_ch), jnp.float32) * 0.2
        gamma = jax.random.uniform(kg, (out_ch,), jnp.float32, 0.5, 1.5)
        beta = jax.random.normal(kb, (out_ch,), jnp.float32) * 0.1
        mean = jax.random.normal(km, (out_ch,), jnp.float32) * 0.1
        var = jax.random.uniform(kv, (out_ch,), jnp.float32, 0.5, 1.5)
        s, shift = fold_bn(gamma, beta, mean, var)
        return w * s[None, :], shift

    p['w1'], p['b1'] = conv_bn_fold(ks[0], ks[1], ks[2], ks[3], ks[4], x2_ch)
    p['w2'], p['b2'] = conv_bn_fold(ks[5], ks[6], ks[7], ks[8], ks[9], x3_ch)
    p['w3'], p['b3'] = conv_bn_fold(ks[10], ks[11], ks[12], ks[13], ks[14], x4_ch)

    # conv3d weights (kd, kh, kw, cin, cout) + bias, BN3d folded in.
    w3d = jax.random.normal(ks[15], (3, 3, 3, out_ch, out_ch), jnp.float32) * 0.05
    b3d = jax.random.normal(ks[16], (out_ch,), jnp.float32) * 0.1
    gamma = jax.random.uniform(ks[17], (out_ch,), jnp.float32, 0.5, 1.5)
    beta = jax.random.normal(ks[18], (out_ch,), jnp.float32) * 0.1
    mean = jax.random.normal(ks[19], (out_ch,), jnp.float32) * 0.1
    var = jax.random.uniform(ks[20], (out_ch,), jnp.float32, 0.5, 1.5)
    s, shift = fold_bn(gamma, beta, mean, var)
    p['w3d'] = w3d * s[None, None, None, None, :]
    p['b3d'] = (b3d - mean) * s + beta
    return p


def msib_forward(p, x2, x3, x4):
    """Inputs in PyTorch NCHW; output NCHW: (N, out_ch, H2, W2)."""
    x2 = jnp.transpose(x2, (0, 2, 3, 1))
    x3 = jnp.transpose(x3, (0, 2, 3, 1))
    x4 = jnp.transpose(x4, (0, 2, 3, 1))
    H, W = x2.shape[1], x2.shape[2]

    a2 = conv1x1_bn_silu(x2, p['w1'], p['b1'])
    a3 = conv1x1_bn_silu(x3, p['w2'], p['b2'])          # stays low-res in HBM
    a4 = conv1x1_bn_silu(x4, p['w3'], p['b3'])          # stays low-res in HBM

    def factors_or_resize(a):
        h, w = a.shape[1], a.shape[2]
        if H % h == 0 and W % w == 0:
            return a, (H // h, W // w)                  # fused in-kernel upsample
        # TODO(synk): non-integer nearest ratio falls back to an XLA gather in HBM.
        return nearest_resize(a, H, W), (1, 1)

    a3, up3 = factors_or_resize(a3)
    a4, up4 = factors_or_resize(a4)

    out = msib_fuse(a2, a3, a4, up3, up4, p['w3d'], p['b3d'])   # (N, H, W, C)
    return jnp.transpose(out, (0, 3, 1, 2))


# --------------------------- pure-JAX reference --------------------------------

def msib_reference(p, x2, x3, x4):
    silu = lambda v: v * jax.nn.sigmoid(v)
    x2 = jnp.transpose(x2, (0, 2, 3, 1))
    x3 = jnp.transpose(x3, (0, 2, 3, 1))
    x4 = jnp.transpose(x4, (0, 2, 3, 1))
    H, W = x2.shape[1], x2.shape[2]
    a2 = silu(jnp.einsum('nhwc,cd->nhwd', x2, p['w1']) + p['b1'])
    a3 = nearest_resize(silu(jnp.einsum('nhwc,cd->nhwd', x3, p['w2']) + p['b2']), H, W)
    a4 = nearest_resize(silu(jnp.einsum('nhwc,cd->nhwd', x4, p['w3']) + p['b3']), H, W)
    x_fuse = jnp.stack([a2, a3, a4], axis=1)            # (N, 3, H, W, C)
    y = lax.conv_general_dilated(
        x_fuse, p['w3d'], window_strides=(1, 1, 1),
        padding=[(1, 1), (1, 1), (1, 1)],
        dimension_numbers=('NDHWC', 'DHWIO', 'NDHWC')) + p['b3d']
    act = jnp.where(y >= 0.0, y, 0.1 * y) + x_fuse
    out = jnp.max(act, axis=1) + jnp.mean(act, axis=1)
    return jnp.transpose(out, (0, 3, 1, 2))


# ----------------------------------- main --------------------------------------

if __name__ == "__main__":
    key = jax.random.PRNGKey(0)
    kx2, kx3, kx4, kp = jax.random.split(key, 4)

    N = 2
    x2_ch, x3_ch, x4_ch, out_ch = 4, 6, 8, 8
    H2 = W2 = 16
    H3 = W3 = 8
    H4 = W4 = 4

    x2 = jax.random.normal(kx2, (N, x2_ch, H2, W2), jnp.float32)
    x3 = jax.random.normal(kx3, (N, x3_ch, H3, W3), jnp.float32)
    x4 = jax.random.normal(kx4, (N, x4_ch, H4, W4), jnp.float32)

    params = init_params(kp, x2_ch, x3_ch, x4_ch, out_ch)

    out = msib_forward(params, x2, x3, x4)
    jax.block_until_ready(out)

    assert out.shape == (N, out_ch, H2, W2), out.shape
    ref = msib_reference(params, x2, x3, x4)
    # tolerance accounts for bf16 MXU operands (f32 accumulation) in the kernels.
    err = float(jnp.max(jnp.abs(out - ref)))
    assert jnp.allclose(out, ref, rtol=2e-2, atol=2e-2), err

    print("KERNEL_OK")
</pallas_src>

<mosaic_0001>
module attributes {stable_mosaic.version = 11 : i64} {
  func.func @_silu_matmul_kernel(%arg0: i32, %arg1: memref<32x64xf32, #tpu.memory_space<vmem>>, %arg2: memref<64x128xbf16, #tpu.memory_space<vmem>>, %arg3: memref<1x128xf32, #tpu.memory_space<vmem>>, %arg4: memref<32x128xf32, #tpu.memory_space<vmem>>) attributes {dimension_semantics = [#tpu.dimension_semantics<parallel>], iteration_bounds = array<i64: 1>, scalar_prefetch = 0 : i64, scratch_operands = 0 : i64, tpu.core_type = #tpu.core_type<tc>, window_params = [{transform_indices = @transform_0, window_bounds = array<i64: 32, 64>}, {pipeline_mode = #tpu.pipeline_mode<synchronous>, transform_indices = @transform_1, window_bounds = array<i64: 64, 128>}, {pipeline_mode = #tpu.pipeline_mode<synchronous>, transform_indices = @transform_2, window_bounds = array<i64: 1, 128>}, {transform_indices = @transform_3, window_bounds = array<i64: 32, 128>}]} {
    %c0 = arith.constant 0 : index
    %c0_0 = arith.constant 0 : index
    %0 = vector.load %arg1[%c0, %c0_0] : memref<32x64xf32, #tpu.memory_space<vmem>>, vector<32x64xf32>
    %1 = arith.truncf %0 : vector<32x64xf32> to vector<32x64xbf16>
    %c0_1 = arith.constant 0 : index
    %c0_2 = arith.constant 0 : index
    %2 = vector.load %arg2[%c0_1, %c0_2] : memref<64x128xbf16, #tpu.memory_space<vmem>>, vector<64x128xbf16>
    %cst = arith.constant dense<0.000000e+00> : vector<32x128xf32>
    %3 = tpu.matmul %1, %2, %cst {dimension_numbers = #tpu.dot_dimension_numbers<[1], [0], [0], [1], [0, 0, 1, 1], [], []>} : vector<32x64xbf16>, vector<64x128xbf16>, vector<32x128xf32> -> vector<32x128xf32>
    %c0_3 = arith.constant 0 : index
    %c0_4 = arith.constant 0 : index
    %4 = vector.load %arg3[%c0_3, %c0_4] : memref<1x128xf32, #tpu.memory_space<vmem>>, vector<1x128xf32>
    %5 = vector.broadcast %4 : vector<1x128xf32> to vector<32x128xf32>
    %6 = arith.addf %3, %5 : vector<32x128xf32>
    %7 = math.absf %6 : vector<32x128xf32>
    %cst_5 = arith.constant 0.000000e+00 : f32
    %8 = vector.broadcast %cst_5 : f32 to vector<32x128xf32>
    %9 = arith.subf %8, %7 : vector<32x128xf32>
    %10 = math.exp %9 : vector<32x128xf32>
    %cst_6 = arith.constant 0.000000e+00 : f32
    %11 = vector.broadcast %cst_6 : f32 to vector<32x128xf32>
    %12 = arith.cmpf oge, %6, %11 : vector<32x128xf32>
    %cst_7 = arith.constant 1.000000e+00 : f32
    %13 = vector.broadcast %cst_7 : f32 to vector<32x128xf32>
    %14 = arith.addf %13, %10 : vector<32x128xf32>
    %cst_8 = arith.constant 1.000000e+00 : f32
    %15 = vector.broadcast %cst_8 : f32 to vector<32x128xf32>
    %16 = arith.divf %15, %14 : vector<32x128xf32>
    %cst_9 = arith.constant 1.000000e+00 : f32
    %17 = vector.broadcast %cst_9 : f32 to vector<32x128xf32>
    %18 = arith.addf %17, %10 : vector<32x128xf32>
    %19 = arith.divf %10, %18 : vector<32x128xf32>
    %20 = arith.select %12, %16, %19 : vector<32x128xi1>, vector<32x128xf32>
    %21 = arith.mulf %6, %20 : vector<32x128xf32>
    %c0_10 = arith.constant 0 : index
    %c0_11 = arith.constant 0 : index
    %22 = vector.load %arg4[%c0_10, %c0_11] : memref<32x128xf32, #tpu.memory_space<vmem>>, vector<32x128xf32>
    tpu.vector_store %arg4[%c0_10, %c0_11], %21 {strides = array<i32>} : memref<32x128xf32, #tpu.memory_space<vmem>>, vector<32x128xf32>,
    return
  }
  func.func @transform_0(%arg0: i32) -> (i32, i32) {
    %c0_i32 = arith.constant 0 : i32
    %c0_i32_0 = arith.constant 0 : i32
    return %arg0, %c0_i32 : i32, i32
  }
  func.func @transform_1(%arg0: i32) -> (i32, i32) {
    %c0_i32 = arith.constant 0 : i32
    %c0_i32_0 = arith.constant 0 : i32
    %c0_i32_1 = arith.constant 0 : i32
    return %c0_i32, %c0_i32_0 : i32, i32
  }
  func.func @transform_2(%arg0: i32) -> (i32, i32) {
    %c0_i32 = arith.constant 0 : i32
    %c0_i32_0 = arith.constant 0 : i32
    %c0_i32_1 = arith.constant 0 : i32
    return %c0_i32, %c0_i32_0 : i32, i32
  }
  func.func @transform_3(%arg0: i32) -> (i32, i32) {
    %c0_i32 = arith.constant 0 : i32
    %c0_i32_0 = arith.constant 0 : i32
    return %arg0, %c0_i32 : i32, i32
  }
}

</mosaic_0001>

<llo_original>
// kernel: tpu_custom_call.1
$region0: #{tpu_custom_call.1}
  #allocation0 [shape = 'u32[]', space=smem, size = 0x4, offset = 0x4, fixed_abs, tag = 'smem constant byte address 0x4 - core index']
  #allocation1 [shape = 'u32[72,128]{1,0:T(1,128)}', space=vmem, size = 0x9000, scoped, tag = 'internal scratch']
  %s0 = inlined_call_operand.hbm [shape: f32[32,64], index: 0, kind: input, shape index: {}]
  %s1 = inlined_call_operand.hbm [shape: bf16[64,128], index: 1, kind: input, shape index: {}]
  %s2 = inlined_call_operand.vmem [shape: f32[1,128], index: 2, kind: input, shape index: {}]
  %s3 = inlined_call_operand.hbm [shape: f32[32,128], index: 3, kind: output, shape index: {}]
  %s4 = sld [smem:[#allocation0]]
  $region30: #{tpu_custom_call.1} parent=0
    _
  %s6 = ssub.s32 1, %s4
  %s7 = scalar_select 0, %s6, %s4
  $region1: #{tpu_custom_call.1} parent=0
    #allocation2 [shape = 'u8[16384]{0}', space=vmem, size = 0x4000, scoped, tag = 'input window, operand 0, single buffered']
    #allocation3 [shape = 's32[1]{0}', space=sflag, size = 0x4, scoped, tag = 'scoped memory for tpu_custom_call.1']
    #allocation4 [shape = 's32[1]{0}', space=sflag, size = 0x4, scoped, tag = 'scoped memory for tpu_custom_call.1']
    #allocation5 [shape = 'u8[16384]{0}', space=vmem, size = 0x4000, scoped, tag = 'input window, operand 1, single buffered']
    #allocation6 [shape = 's32[1]{0}', space=sflag, size = 0x4, scoped, tag = 'scoped memory for tpu_custom_call.1']
    #allocation7 [shape = 'u8[16384]{0}', space=vmem, size = 0x4000, scoped, tag = 'output window, operand 0, single buffered']
    %8 = vsyncpa [#allocation3], 0
    %9 = vsyncpa [#allocation6], 0
    %10 = vsyncpa [#allocation4], 0
    // Predicated region
    $region2: #{tpu_custom_call.1} parent=1 // pred_check
      _
    $region3: #{tpu_custom_call.1} parent=1 // pred_check_branch
      %12 = sbr.rel (0) target = $region5
    $region4: #{tpu_custom_call.1} parent=1 // pred_region
      %14 = vsyncadd [#allocation3], 0
      %s15 = sshll.u32 %s0, 4
      %s16 = int_to_ptr.hbm [resolvable:$true] %s15
      %s17 = sshll.u32 [#allocation2], 4
      %s18 = int_to_ptr.vmem [resolvable:$true] %s17
      %23 = dma.hbm_to_vmem [thread:$0]  %s16, 512, %s18, [#allocation3], 128, 128, 8
    $region5: #{tpu_custom_call.1} parent=1 // pred_fallthru
      _
    // Predicated region
    $region6: #{tpu_custom_call.1} parent=1 // pred_check
      _
    $region7: #{tpu_custom_call.1} parent=1 // pred_check_branch
      %25 = sbr.rel (0) target = $region9
    $region8: #{tpu_custom_call.1} parent=1 // pred_region
      %27 = vsyncadd [#allocation6], 0
      %s28 = sshll.u32 %s1, 4
      %s29 = int_to_ptr.hbm [resolvable:$true] %s28
      %s30 = sshll.u32 [#allocation5], 4
      %s31 = int_to_ptr.vmem [resolvable:$true] %s30
      %36 = dma.hbm_to_vmem [thread:$0]  %s29, 512, %s31, [#allocation6], 64, 64, 4
    $region9: #{tpu_custom_call.1} parent=1 // pred_fallthru
      _
    // Predicated region
    $region10: #{tpu_custom_call.1} parent=1 // pred_check
      _
    $region11: #{tpu_custom_call.1} parent=1 // pred_check_branch
      %38 = sbr.rel (0) target = $region13
    $region12: #{tpu_custom_call.1} parent=1 // pred_region
      _
    $region13: #{tpu_custom_call.1} parent=1 // pred_fallthru
      _
    // Predicated region
    $region14: #{tpu_custom_call.1} parent=1 // pred_check
      _
    $region15: #{tpu_custom_call.1} parent=1 // pred_check_branch
      %40 = sbr.rel (0) target = $region17
    $region16: #{tpu_custom_call.1} parent=1 // pred_region
      %42 = dma.done [#allocation3], 512
    $region17: #{tpu_custom_call.1} parent=1 // pred_fallthru
      _
    // Predicated region
    $region18: #{tpu_custom_call.1} parent=1 // pred_check
      _
    $region19: #{tpu_custom_call.1} parent=1 // pred_check_branch
      %44 = sbr.rel (0) target = $region21
    $region20: #{tpu_custom_call.1} parent=1 // pred_region
      %46 = dma.done [#allocation6], 512
    $region21: #{tpu_custom_call.1} parent=1 // pred_fallthru
      _
    %v48 = vld [vmem:[#allocation2] sm:$0xff]
    %v49 = vld [vmem:[#allocation2 + $0x8] sm:$0xff]
    %v50 = vld [vmem:[#allocation2 + $0x10] sm:$0xff]
    %v51 = vld [vmem:[#allocation2 + $0x18] sm:$0xff]
    %v52 = vpack.c.bf16 %v49, %v48
    %v53 = vpack.c.bf16 %v51, %v50
    %v54 = vld [vmem:[#allocation5] sm:$0xf]
    %v55 = vld [vmem:[#allocation5 + $0x4] sm:$0xf]
    %v56 = vld [vmem:[#allocation5 + $0x8] sm:$0xf]
    %v57 = vld [vmem:[#allocation5 + $0xc] sm:$0xf]
    %v58 = vld [vmem:[#allocation5 + $0x10] sm:$0xf]
    %v59 = vld [vmem:[#allocation5 + $0x14] sm:$0xf]
    %v60 = vld [vmem:[#allocation5 + $0x18] sm:$0xf]
    %v61 = vld [vmem:[#allocation5 + $0x1c] sm:$0xf]
    %v62 = vld [vmem:[%s2] sm:$0x1]
    %v64 = vperm.slane %v62, 0
    %v74 = vunpack.c.l.b16 %v54
    %v75 = vunpack.c.l.b16 %v55
    %v76 = vunpack.c.l.b16 %v56
    %v77 = vunpack.c.l.b16 %v57
    %v78 = vunpack.c.l.b16 %v58
    %v79 = vunpack.c.l.b16 %v59
    %v80 = vunpack.c.l.b16 %v60
    %v81 = vunpack.c.l.b16 %v61
    %v82 = vpack.c.b16 %v75, %v74
    %v83 = vpack.c.b16 %v77, %v76
    %v84 = vpack.c.b16 %v79, %v78
    %v85 = vpack.c.b16 %v81, %v80
    %vm90 = vcmask 523264
    %v92 = vsel %vm90, %v52, 0
    %v95 = vsel %vm90, %v53, 0
    %97 = vmatpush.bf16.msra.mxu0 0
    %98 = vmatpush.bf16.msra.mxu0 0
    %99 = vmatpush.bf16.msra.mxu0 0
    %100 = vmatpush.bf16.msra.mxu0 0
    %101 = vmatpush.bf16.msra.mxu0 %v85
    %102 = vmatpush.bf16.msra.mxu0 %v84
    %103 = vmatpush.bf16.msra.mxu0 %v83
    %104 = vmatpush.bf16.msra.mxu0 %v82
    %105 = vmatmul.bf16.gmra.mxu0 %v92
    %v106 = vpop.f32.mrf.mxu0
    %v107 = vadd.f32 %v64, %v106
    %v108 = vpop.f32.mrf.mxu0
    %v109 = vadd.f32 %v64, %v108
    %110 = vmatmul.bf16.gmra.mxu0 %v95
    %v111 = vpop.f32.mrf.mxu0
    %v112 = vadd.f32 %v64, %v111
    %v113 = vpop.f32.mrf.mxu0
    %v114 = vadd.f32 %v64, %v113
    %115 = vdwg.mxu0
    %v116 = vand.u32 2147483647, %v107
    %v117 = vand.u32 2147483647, %v109
    %v118 = vand.u32 2147483647, %v112
    %v119 = vand.u32 2147483647, %v114
    %v120 = vsub.f32 0.0, %v116
    %v121 = vsub.f32 0.0, %v117
    %v122 = vsub.f32 0.0, %v118
    %v123 = vsub.f32 0.0, %v119
    %v124 = vmul.f32 %v120, 1.442695
    %v125 = vpow.pop %v124
    %v126 = vmul.f32 %v121, 1.442695
    %v127 = vpow.pop %v126
    %v128 = vmul.f32 %v122, 1.442695
    %v129 = vpow.pop %v128
    %v130 = vmul.f32 %v123, 1.442695
    %v131 = vpow.pop %v130
    %vm132 = vcmp.ge.f32.partialorder %v107, 0.0
    %vm133 = vcmp.ge.f32.partialorder %v109, 0.0
    %vm134 = vcmp.ge.f32.partialorder %v112, 0.0
    %vm135 = vcmp.ge.f32.partialorder %v114, 0.0
    %v136 = vadd.f32 %v125, 1.0
    %v137 = vadd.f32 %v127, 1.0
    %v138 = vadd.f32 %v129, 1.0
    %v139 = vadd.f32 %v131, 1.0
    %v140 = vrcp.pop %v136
    %v141 = vmul.f32 %v136, %v140
    %v142 = vsub.f32 1.0, %v141
    %v143 = vmul.f32 %v140, %v142
    %v144 = vadd.f32 %v140, %v143
    %vm145 = vweird.f32 %v136
    %vm146 = vweird.f32 %v140
    %vm147 = vmor %vm145, %vm146
    %v148 = vsel %vm147, %v140, %v144
    %v149 = vand.u32 2147483647, %v136
    %vm150 = vcmp.eq.f32.partialorder %v149, 8.507059e+37
    %v151 = vand.u32 %v136, 2147483648
    %v152 = vor.u32 1.1754944e-38, %v151
    %v153 = vsel %vm150, %v152, %v148
    %v154 = vmul.f32 1.0, %v153
    %v155 = vrcp.pop %v137
    %v156 = vmul.f32 %v137, %v155
    %v157 = vsub.f32 1.0, %v156
    %v158 = vmul.f32 %v155, %v157
    %v159 = vadd.f32 %v155, %v158
    %vm160 = vweird.f32 %v137
    %vm161 = vweird.f32 %v155
    %vm162 = vmor %vm160, %vm161
    %v163 = vsel %vm162, %v155, %v159
    %v164 = vand.u32 2147483647, %v137
    %vm165 = vcmp.eq.f32.partialorder %v164, 8.507059e+37
    %v166 = vand.u32 %v137, 2147483648
    %v167 = vor.u32 1.1754944e-38, %v166
    %v168 = vsel %vm165, %v167, %v163
    %v169 = vmul.f32 1.0, %v168
    %v170 = vrcp.pop %v138
    %v171 = vmul.f32 %v138, %v170
    %v172 = vsub.f32 1.0, %v171
    %v173 = vmul.f32 %v170, %v172
    %v174 = vadd.f32 %v170, %v173
    %vm175 = vweird.f32 %v138
    %vm176 = vweird.f32 %v170
    %vm177 = vmor %vm175, %vm176
    %v178 = vsel %vm177, %v170, %v174
    %v179 = vand.u32 2147483647, %v138
    %vm180 = vcmp.eq.f32.partialorder %v179, 8.507059e+37
    %v181 = vand.u32 %v138, 2147483648
    %v182 = vor.u32 1.1754944e-38, %v181
    %v183 = vsel %vm180, %v182, %v178
    %v184 = vmul.f32 1.0, %v183
    %v185 = vrcp.pop %v139
    %v186 = vmul.f32 %v139, %v185
    %v187 = vsub.f32 1.0, %v186
    %v188 = vmul.f32 %v185, %v187
    %v189 = vadd.f32 %v185, %v188
    %vm190 = vweird.f32 %v139
    %vm191 = vweird.f32 %v185
    %vm192 = vmor %vm190, %vm191
    %v193 = vsel %vm192, %v185, %v189
    %v194 = vand.u32 2147483647, %v139
    %vm195 = vcmp.eq.f32.partialorder %v194, 8.507059e+37
    %v196 = vand.u32 %v139, 2147483648
    %v197 = vor.u32 1.1754944e-38, %v196
    %v198 = vsel %vm195, %v197, %v193
    %v199 = vmul.f32 1.0, %v198
    %v200 = vmul.f32 %v125, %v153
    %v201 = vmul.f32 %v127, %v168
    %v202 = vmul.f32 %v129, %v183
    %v203 = vmul.f32 %v131, %v198
    %v204 = vsel %vm132, %v154, %v200
    %v205 = vsel %vm133, %v169, %v201
    %v206 = vsel %vm134, %v184, %v202
    %v207 = vsel %vm135, %v199, %v203
    %v208 = vmul.f32 %v107, %v204
    %v209 = vmul.f32 %v109, %v205
    %v210 = vmul.f32 %v112, %v206
    %v211 = vmul.f32 %v114, %v207
    %212 = vst [vmem:[#allocation7] sm:$0xff] %v208
    %213 = vst [vmem:[#allocation7 + $0x8] sm:$0xff] %v209
    %214 = vst [vmem:[#allocation7 + $0x10] sm:$0xff] %v210
    %215 = vst [vmem:[#allocation7 + $0x18] sm:$0xff] %v211
    // Predicated region
    $region22: #{tpu_custom_call.1} parent=1 // pred_check
      _
    $region23: #{tpu_custom_call.1} parent=1 // pred_check_branch
      %217 = sbr.rel (0) target = $region25
    $region24: #{tpu_custom_call.1} parent=1 // pred_region
      %219 = vsyncadd [#allocation4], 0
      %s220 = sshll.u32 [#allocation7], 4
      %s221 = int_to_ptr.vmem [resolvable:$true] %s220
      %s222 = sshll.u32 %s3, 4
      %s223 = int_to_ptr.hbm [resolvable:$true] %s222
      %228 = dma.vmem_to_hbm [thread:$0]  %s221, 512, %s223, [#allocation4], 128, 128, 8
    $region25: #{tpu_custom_call.1} parent=1 // pred_fallthru
      _
    // Predicated region
    $region26: #{tpu_custom_call.1} parent=1 // pred_check
      _
    $region27: #{tpu_custom_call.1} parent=1 // pred_check_branch
      %230 = sbr.rel (0) target = $region29
    $region28: #{tpu_custom_call.1} parent=1 // pred_region
      %232 = dma.done [#allocation4], 512
    $region29: #{tpu_custom_call.1} parent=1 // pred_fallthru
      _
    %233 = vsyncpa [#allocation3], 1
    %234 = vsyncpa [#allocation6], 1
    %235 = vsyncpa [#allocation4], 1

</llo_original>
